<compile_context>
chip_gen: v5e
topology: v5e:2x2
jax: 0.10.0
libtpu: 0.0.40
codegen_flags: <defaults>
</compile_context>

<pallas_src>
import jax
import jax.numpy as jnp
from jax.experimental import pallas as pl
from jax.experimental.pallas import tpu as pltpu

_LANE = 128
_SUBLANE = 8


def _round_up(x, m):
    return (x + m - 1) // m * m


# ----------------------------------------------------------------------------
# Fused kernel: BN(affine)+ReLU  ->  [Linear(+folded BN)+ReLU] * num_layers
# ----------------------------------------------------------------------------
def _make_fused_mlp_kernel(num_layers, input_dim, out_dims):
    """Kernel body for a fixed (static) layer stack.

    Ref order: x_ref, packed_ref, w_ref[0..L-1], o_ref
      packed_ref rows: [0]=input BN scale, [1]=input BN shift, [2+i]=bias_i
    """

    def kernel(*refs):
        x_ref = refs[0]
        p_ref = refs[1]
        w_refs = refs[2:2 + num_layers]
        o_ref = refs[2 + num_layers]

        # Input BatchNorm (eval, folded affine) + ReLU in f32 (VPU).
        scale = p_ref[pl.ds(0, 1), pl.ds(0, input_dim)]          # (1, D)
        shift = p_ref[pl.ds(1, 1), pl.ds(0, input_dim)]          # (1, D)
        h = jnp.maximum(x_ref[...].astype(jnp.float32) * scale + shift, 0.0)

        # Hidden layers: relu(h @ w' + b'), BN already folded into w'/b'.
        # bf16 MXU operands, f32 accumulation, f32 epilogue.
        for i in range(num_layers):
            n = out_dims[i]
            b = p_ref[pl.ds(2 + i, 1), pl.ds(0, n)]              # (1, n)
            h = jnp.dot(h.astype(jnp.bfloat16), w_refs[i][...],
                        preferred_element_type=jnp.float32) + b
            h = jnp.maximum(h, 0.0)

        o_ref[...] = h.astype(o_ref.dtype)

    return kernel


# ----------------------------------------------------------------------------
# One-time parameter transformation: fold BN into Linear, cast weights to bf16.
# ----------------------------------------------------------------------------
def prepare_fused_params(params, input_dim, ffn_dim):
    num_layers = len(ffn_dim)
    vec_w = _round_up(max([input_dim] + list(ffn_dim)), _LANE)

    # Packed small-vector slab: input BN scale/shift + per-layer folded biases.
    packed = jnp.zeros((2 + num_layers, vec_w), jnp.float32)
    in_scale, in_shift = params['bn_input']
    packed = packed.at[0, :input_dim].set(in_scale.astype(jnp.float32))
    packed = packed.at[1, :input_dim].set(in_shift.astype(jnp.float32))

    weights = []
    for i, layer in enumerate(params['layers']):
        s, sh = layer['bn']
        w = layer['w'].astype(jnp.float32)
        b = layer['b'].astype(jnp.float32)
        # Fold BatchNorm (eval) into the Linear:
        #   (h@w + b)*s + sh == h@(w*s) + (b*s + sh)
        w_fold = (w * s[None, :]).astype(jnp.bfloat16)   # bf16 MXU operand
        b_fold = b * s + sh                              # f32 epilogue
        weights.append(w_fold)
        packed = packed.at[2 + i, :ffn_dim[i]].set(b_fold)

    return {
        'packed': packed,
        'weights': weights,
        'input_dim': input_dim,
        'ffn_dim': tuple(ffn_dim),
    }


# ----------------------------------------------------------------------------
# Forward pass: single pallas_call over a batch-tiled grid.
# ----------------------------------------------------------------------------
def _pick_batch_tile(B, cap=256):
    # >=2 grid steps when the batch allows so both v7x TCs get work under
    # dimension_semantics=("parallel",); cap amortizes the ~0.35us/step
    # overhead.  Raise cap to 512 on v6e for very large batches; keep 256 on v5e.
    tm = _round_up(max(1, (B + 1) // 2), _SUBLANE)
    return max(_SUBLANE, min(cap, tm))


def xdeepfm_deep_forward(fused, x, *, tile_cap=256):
    B, D = x.shape
    assert D == fused['input_dim']
    weights = fused['weights']
    packed = fused['packed']
    ffn_dim = list(fused['ffn_dim'])
    num_layers = len(weights)
    final_dim = ffn_dim[-1]

    tm = _pick_batch_tile(B, tile_cap)
    grid = (pl.cdiv(B, tm),)   # ragged last block: OOB rows discarded (safe,
                               # no cross-row reduction; output rows >= B dropped)

    kernel = _make_fused_mlp_kernel(num_layers, D, ffn_dim)

    in_specs = [
        pl.BlockSpec((tm, D), lambda i: (i, 0)),               # x tile, unpadded
        pl.BlockSpec(packed.shape, lambda i: (0, 0)),          # packed vectors
    ]
    for w in weights:
        in_specs.append(pl.BlockSpec(w.shape, lambda i: (0, 0)))  # resident W

    # Cost hint for XLA scheduling around the call (e.g. against CIN branch).
    dims_in = [D] + ffn_dim[:-1]
    flops = 2 * B * sum(k * n for k, n in zip(dims_in, ffn_dim))
    bytes_accessed = (B * D * 4 + B * final_dim * 4
                      + int(packed.size) * 4
                      + sum(int(w.size) * 2 for w in weights))

    # Explicit VMEM budget: double-buffered x/out tiles, resident weights,
    # packed slab, activation head-room (important under v7x's 64 MiB VMEM).
    vmem_need = 2 * (tm * D * 4 + tm * final_dim * 4
                     + int(packed.size) * 4
                     + sum(int(w.size) * 2 for w in weights))
    vmem_need += 4 * tm * max(ffn_dim + [D]) * 4
    vmem_limit = int(min(96 << 20, max(4 << 20, 2 * vmem_need)))

    out = pl.pallas_call(
        kernel,
        out_shape=jax.ShapeDtypeStruct((B, final_dim), jnp.float32),
        grid_spec=pltpu.PrefetchScalarGridSpec(
            num_scalar_prefetch=0,
            grid=grid,
            in_specs=in_specs,
            out_specs=pl.BlockSpec((tm, final_dim), lambda i: (i, 0)),
        ),
        compiler_params=pltpu.CompilerParams(
            dimension_semantics=("parallel",),
            vmem_limit_bytes=vmem_limit),
        cost_estimate=pl.CostEstimate(
            flops=flops, transcendentals=0, bytes_accessed=bytes_accessed),
    )(x.astype(jnp.float32), packed, *weights)

    return out


# ----------------------------------------------------------------------------
# Parameter construction (deterministic, mirrors nn.Module __init__ shapes)
# ----------------------------------------------------------------------------
def init_params(key, input_dim, ffn_dim):
    params = {}
    eps = 1e-5

    def bn_params(k, dim):
        kg, kb, km, kv = jax.random.split(k, 4)
        gamma = jax.random.uniform(kg, (dim,), jnp.float32, 0.5, 1.5)
        beta = jax.random.uniform(kb, (dim,), jnp.float32, -0.5, 0.5)
        mean = jax.random.normal(km, (dim,), jnp.float32) * 0.1
        var = jax.random.uniform(kv, (dim,), jnp.float32, 0.5, 1.5)
        scale = gamma / jnp.sqrt(var + eps)
        shift = beta - mean * scale
        return scale, shift

    keys = jax.random.split(key, 2 * len(ffn_dim) + 2)
    params['bn_input'] = bn_params(keys[0], input_dim)

    dims_in = [input_dim] + ffn_dim[:-1]
    layers = []
    for i, (din, dout) in enumerate(zip(dims_in, ffn_dim)):
        kw, kb = jax.random.split(keys[1 + i], 2)
        bound = 1.0 / jnp.sqrt(jnp.float32(din))
        # PyTorch nn.Linear default init: U(-1/sqrt(fan_in), 1/sqrt(fan_in))
        w = jax.random.uniform(kw, (din, dout), jnp.float32, -bound, bound)
        b = jax.random.uniform(kb, (dout,), jnp.float32, -bound, bound)
        bn = bn_params(keys[1 + len(ffn_dim) + i], dout)
        layers.append({'w': w, 'b': b, 'bn': bn})
    params['layers'] = layers
    return params


# ----------------------------------------------------------------------------
# Pure-JAX reference (unfolded, f32) for correctness checking
# ----------------------------------------------------------------------------
def xdeepfm_deep_reference(params, x):
    scale, shift = params['bn_input']
    h = jnp.maximum(x * scale + shift, 0.0)
    for layer in params['layers']:
        s, sh = layer['bn']
        h = jnp.maximum((h @ layer['w'] + layer['b']) * s + sh, 0.0)
    return h


if __name__ == "__main__":
    # Module config: input_dim=32, ffn_dim=[64, 32], ffn_dropout=[0.1, 0.1, 0.1]
    input_dim = 32
    ffn_dim = [64, 32]
    batch = 8

    key = jax.random.PRNGKey(0)
    kx, kp = jax.random.split(key)
    x = jax.random.normal(kx, (batch, input_dim), jnp.float32)
    params = init_params(kp, input_dim, ffn_dim)

    fused = prepare_fused_params(params, input_dim, ffn_dim)
    out = xdeepfm_deep_forward(fused, x)
    out = jax.block_until_ready(out)

    ref = xdeepfm_deep_reference(params, x)
    assert out.shape == (batch, ffn_dim[-1])
    # bf16 MXU operands (f32 accumulation) -> loosened tolerance vs f32 ref.
    assert jnp.allclose(out, ref, atol=3e-2, rtol=3e-2), "mismatch vs reference"

    print("KERNEL_OK")
</pallas_src>

<mosaic_0001>
module attributes {stable_mosaic.version = 11 : i64} {
  func.func @kernel(%arg0: i32, %arg1: memref<8x32xf32, #tpu.memory_space<vmem>>, %arg2: memref<4x128xf32, #tpu.memory_space<vmem>>, %arg3: memref<32x64xbf16, #tpu.memory_space<vmem>>, %arg4: memref<64x32xbf16, #tpu.memory_space<vmem>>, %arg5: memref<8x32xf32, #tpu.memory_space<vmem>>) attributes {dimension_semantics = [#tpu.dimension_semantics<parallel>], iteration_bounds = array<i64: 1>, scalar_prefetch = 0 : i64, scratch_operands = 0 : i64, tpu.core_type = #tpu.core_type<tc>, window_params = [{transform_indices = @transform_0, window_bounds = array<i64: 8, 32>}, {pipeline_mode = #tpu.pipeline_mode<synchronous>, transform_indices = @transform_1, window_bounds = array<i64: 4, 128>}, {pipeline_mode = #tpu.pipeline_mode<synchronous>, transform_indices = @transform_2, window_bounds = array<i64: 32, 64>}, {pipeline_mode = #tpu.pipeline_mode<synchronous>, transform_indices = @transform_3, window_bounds = array<i64: 64, 32>}, {transform_indices = @transform_4, window_bounds = array<i64: 8, 32>}]} {
    %c0 = arith.constant 0 : index
    %c0_0 = arith.constant 0 : index
    %0 = vector.load %arg2[%c0, %c0_0] : memref<4x128xf32, #tpu.memory_space<vmem>>, vector<1x32xf32>
    %c1 = arith.constant 1 : index
    %c0_1 = arith.constant 0 : index
    %1 = vector.load %arg2[%c1, %c0_1] : memref<4x128xf32, #tpu.memory_space<vmem>>, vector<1x32xf32>
    %c0_2 = arith.constant 0 : index
    %c0_3 = arith.constant 0 : index
    %2 = vector.load %arg1[%c0_2, %c0_3] : memref<8x32xf32, #tpu.memory_space<vmem>>, vector<8x32xf32>
    %3 = vector.broadcast %0 : vector<1x32xf32> to vector<8x32xf32>
    %4 = arith.mulf %2, %3 : vector<8x32xf32>
    %5 = vector.broadcast %1 : vector<1x32xf32> to vector<8x32xf32>
    %6 = arith.addf %4, %5 : vector<8x32xf32>
    %cst = arith.constant 0.000000e+00 : f32
    %7 = vector.broadcast %cst : f32 to vector<8x32xf32>
    %8 = arith.maximumf %6, %7 : vector<8x32xf32>
    %c2 = arith.constant 2 : index
    %c0_4 = arith.constant 0 : index
    %9 = vector.load %arg2[%c2, %c0_4] : memref<4x128xf32, #tpu.memory_space<vmem>>, vector<1x64xf32>
    %10 = arith.truncf %8 : vector<8x32xf32> to vector<8x32xbf16>
    %c0_5 = arith.constant 0 : index
    %c0_6 = arith.constant 0 : index
    %11 = vector.load %arg3[%c0_5, %c0_6] : memref<32x64xbf16, #tpu.memory_space<vmem>>, vector<32x64xbf16>
    %cst_7 = arith.constant dense<0.000000e+00> : vector<8x64xf32>
    %12 = tpu.matmul %10, %11, %cst_7 {dimension_numbers = #tpu.dot_dimension_numbers<[1], [0], [0], [1], [0, 0, 1, 1], [], []>} : vector<8x32xbf16>, vector<32x64xbf16>, vector<8x64xf32> -> vector<8x64xf32>
    %13 = vector.broadcast %9 : vector<1x64xf32> to vector<8x64xf32>
    %14 = arith.addf %12, %13 : vector<8x64xf32>
    %cst_8 = arith.constant 0.000000e+00 : f32
    %15 = vector.broadcast %cst_8 : f32 to vector<8x64xf32>
    %16 = arith.maximumf %14, %15 : vector<8x64xf32>
    %c3 = arith.constant 3 : index
    %c0_9 = arith.constant 0 : index
    %17 = vector.load %arg2[%c3, %c0_9] : memref<4x128xf32, #tpu.memory_space<vmem>>, vector<1x32xf32>
    %18 = arith.truncf %16 : vector<8x64xf32> to vector<8x64xbf16>
    %c0_10 = arith.constant 0 : index
    %c0_11 = arith.constant 0 : index
    %19 = vector.load %arg4[%c0_10, %c0_11] : memref<64x32xbf16, #tpu.memory_space<vmem>>, vector<64x32xbf16>
    %cst_12 = arith.constant dense<0.000000e+00> : vector<8x32xf32>
    %20 = tpu.matmul %18, %19, %cst_12 {dimension_numbers = #tpu.dot_dimension_numbers<[1], [0], [0], [1], [0, 0, 1, 1], [], []>} : vector<8x64xbf16>, vector<64x32xbf16>, vector<8x32xf32> -> vector<8x32xf32>
    %21 = vector.broadcast %17 : vector<1x32xf32> to vector<8x32xf32>
    %22 = arith.addf %20, %21 : vector<8x32xf32>
    %cst_13 = arith.constant 0.000000e+00 : f32
    %23 = vector.broadcast %cst_13 : f32 to vector<8x32xf32>
    %24 = arith.maximumf %22, %23 : vector<8x32xf32>
    %c0_14 = arith.constant 0 : index
    %c0_15 = arith.constant 0 : index
    %25 = vector.load %arg5[%c0_14, %c0_15] : memref<8x32xf32, #tpu.memory_space<vmem>>, vector<8x32xf32>
    tpu.vector_store %arg5[%c0_14, %c0_15], %24 {strides = array<i32>} : memref<8x32xf32, #tpu.memory_space<vmem>>, vector<8x32xf32>,
    return
  }
  func.func @transform_0(%arg0: i32) -> (i32, i32) {
    %c0_i32 = arith.constant 0 : i32
    %c0_i32_0 = arith.constant 0 : i32
    return %arg0, %c0_i32 : i32, i32
  }
  func.func @transform_1(%arg0: i32) -> (i32, i32) {
    %c0_i32 = arith.constant 0 : i32
    %c0_i32_0 = arith.constant 0 : i32
    %c0_i32_1 = arith.constant 0 : i32
    return %c0_i32, %c0_i32_0 : i32, i32
  }
  func.func @transform_2(%arg0: i32) -> (i32, i32) {
    %c0_i32 = arith.constant 0 : i32
    %c0_i32_0 = arith.constant 0 : i32
    %c0_i32_1 = arith.constant 0 : i32
    return %c0_i32, %c0_i32_0 : i32, i32
  }
  func.func @transform_3(%arg0: i32) -> (i32, i32) {
    %c0_i32 = arith.constant 0 : i32
    %c0_i32_0 = arith.constant 0 : i32
    %c0_i32_1 = arith.constant 0 : i32
    return %c0_i32, %c0_i32_0 : i32, i32
  }
  func.func @transform_4(%arg0: i32) -> (i32, i32) {
    %c0_i32 = arith.constant 0 : i32
    %c0_i32_0 = arith.constant 0 : i32
    return %arg0, %c0_i32 : i32, i32
  }
}

</mosaic_0001>

<llo_original>
// kernel: tpu_custom_call.1
$region0: #{tpu_custom_call.1}
  #allocation0 [shape = 'u32[]', space=smem, size = 0x4, offset = 0x4, fixed_abs, tag = 'smem constant byte address 0x4 - core index']
  #allocation1 [shape = 'u32[72,128]{1,0:T(1,128)}', space=vmem, size = 0x9000, scoped, tag = 'internal scratch']
  %s0 = inlined_call_operand.vmem [shape: f32[8,32], index: 0, kind: input, shape index: {}]
  %s1 = inlined_call_operand.vmem [shape: f32[4,128], index: 1, kind: input, shape index: {}]
  %s2 = inlined_call_operand.vmem [shape: bf16[32,64], index: 2, kind: input, shape index: {}]
  %s3 = inlined_call_operand.vmem [shape: bf16[64,32], index: 3, kind: input, shape index: {}]
  %s4 = inlined_call_operand.hbm [shape: f32[8,32], index: 4, kind: output, shape index: {}]
  %s5 = sld [smem:[#allocation0]]
  $region26: #{tpu_custom_call.1} parent=0
    _
  %s7 = ssub.s32 1, %s5
  %s8 = scalar_select 0, %s7, %s5
  $region1: #{tpu_custom_call.1} parent=0
    #allocation2 [shape = 'u8[4096]{0}', space=vmem, size = 0x1000, scoped, tag = 'output window, operand 0, single buffered']
    #allocation3 [shape = 's32[1]{0}', space=sflag, size = 0x4, scoped, tag = 'scoped memory for tpu_custom_call.1']
    %9 = vsyncpa [#allocation3], 0
    // Predicated region
    $region2: #{tpu_custom_call.1} parent=1 // pred_check
      _
    $region3: #{tpu_custom_call.1} parent=1 // pred_check_branch
      %11 = sbr.rel (0) target = $region5
    $region4: #{tpu_custom_call.1} parent=1 // pred_region
      _
    $region5: #{tpu_custom_call.1} parent=1 // pred_fallthru
      _
    // Predicated region
    $region6: #{tpu_custom_call.1} parent=1 // pred_check
      _
    $region7: #{tpu_custom_call.1} parent=1 // pred_check_branch
      %13 = sbr.rel (0) target = $region9
    $region8: #{tpu_custom_call.1} parent=1 // pred_region
      _
    $region9: #{tpu_custom_call.1} parent=1 // pred_fallthru
      _
    // Predicated region
    $region10: #{tpu_custom_call.1} parent=1 // pred_check
      _
    $region11: #{tpu_custom_call.1} parent=1 // pred_check_branch
      %15 = sbr.rel (0) target = $region13
    $region12: #{tpu_custom_call.1} parent=1 // pred_region
      _
    $region13: #{tpu_custom_call.1} parent=1 // pred_fallthru
      _
    // Predicated region
    $region14: #{tpu_custom_call.1} parent=1 // pred_check
      _
    $region15: #{tpu_custom_call.1} parent=1 // pred_check_branch
      %17 = sbr.rel (0) target = $region17
    $region16: #{tpu_custom_call.1} parent=1 // pred_region
      _
    $region17: #{tpu_custom_call.1} parent=1 // pred_fallthru
      _
    %v19 = vld [vmem:[%s1] sm:$0x1]
    %v20 = vld [vmem:[%s1 + $0x1] sm:$0x1]
    %v21 = vld [vmem:[%s0] sm:$0xff]
    %v22 = vperm.slane %v19, 0
    %v23 = vmul.f32 %v21, %v22
    %v24 = vperm.slane %v20, 0
    %v25 = vadd.f32 %v23, %v24
    %v26 = vmax.f32 %v25, 0.0
    %v27 = vld [vmem:[%s1 + $0x2] sm:$0x1]
    %v28 = vpack.c.bf16 %v26, %v26
    %v29 = vld [vmem:[%s2] sm:$0xf]
    %v30 = vld [vmem:[%s2 + $0x4] sm:$0xf]
    %v31 = vld [vmem:[%s2 + $0x8] sm:$0xf]
    %v32 = vld [vmem:[%s2 + $0xc] sm:$0xf]
    %v33 = vperm.slane %v27, 0
    %v38 = vunpack.c.l.b16 %v29
    %v39 = vunpack.c.l.b16 %v30
    %v40 = vunpack.c.l.b16 %v31
    %v41 = vunpack.c.l.b16 %v32
    %v42 = vpack.c.b16 %v39, %v38
    %v43 = vpack.c.b16 %v41, %v40
    %vm46 = vcmask 261120
    %v48 = vsel %vm46, %v28, 0
    %50 = vmatpush.bf16.msra.mxu0 0
    %51 = vmatpush.bf16.msra.mxu0 0
    %52 = vmatpush.bf16.msra.mxu0 0
    %53 = vmatpush.bf16.msra.mxu0 0
    %54 = vmatpush.bf16.msra.mxu0 0
    %55 = vmatpush.bf16.msra.mxu0 0
    %56 = vmatpush.bf16.msra.mxu0 %v43
    %57 = vmatpush.bf16.msra.mxu0 %v42
    %58 = vmatmul.bf16.gmra.mxu0 %v48
    %v59 = vpop.f32.mrf.mxu0
    %v60 = vadd.f32 %v33, %v59
    %v61 = vpop.f32.mrf.mxu0
    %62 = vdwg.mxu0
    %v63 = vmax.f32 %v60, 0.0
    %v64 = vld [vmem:[%s1 + $0x3] sm:$0x1]
    %v65 = vpack.c.bf16 %v63, %v63
    %v66 = vld [vmem:[%s3] sm:$0xf]
    %v67 = vld [vmem:[%s3 + $0x4] sm:$0xf]
    %v68 = vld [vmem:[%s3 + $0x8] sm:$0xf]
    %v69 = vld [vmem:[%s3 + $0xc] sm:$0xf]
    %v70 = vld [vmem:[%s3 + $0x10] sm:$0xf]
    %v71 = vld [vmem:[%s3 + $0x14] sm:$0xf]
    %v72 = vld [vmem:[%s3 + $0x18] sm:$0xf]
    %v73 = vld [vmem:[%s3 + $0x1c] sm:$0xf]
    %v74 = vperm.slane %v64, 0
    %v83 = vunpack.c.l.b16 %v66
    %v84 = vunpack.c.l.b16 %v67
    %v85 = vunpack.c.l.b16 %v68
    %v86 = vunpack.c.l.b16 %v69
    %v87 = vunpack.c.l.b16 %v70
    %v88 = vunpack.c.l.b16 %v71
    %v89 = vunpack.c.l.b16 %v72
    %v90 = vunpack.c.l.b16 %v73
    %v91 = vpack.c.b16 %v84, %v83
    %v92 = vpack.c.b16 %v86, %v85
    %v93 = vpack.c.b16 %v88, %v87
    %v94 = vpack.c.b16 %v90, %v89
    %vm99 = vcmask 523264
    %v101 = vsel %vm99, %v65, 0
    %103 = vmatpush.bf16.msra.mxu0 0
    %104 = vmatpush.bf16.msra.mxu0 0
    %105 = vmatpush.bf16.msra.mxu0 0
    %106 = vmatpush.bf16.msra.mxu0 0
    %107 = vmatpush.bf16.msra.mxu0 %v94
    %108 = vmatpush.bf16.msra.mxu0 %v93
    %109 = vmatpush.bf16.msra.mxu0 %v92
    %110 = vmatpush.bf16.msra.mxu0 %v91
    %111 = vmatmul.bf16.gmra.mxu0 %v101
    %v112 = vpop.f32.mrf.mxu0
    %v113 = vadd.f32 %v74, %v112
    %v114 = vpop.f32.mrf.mxu0
    %115 = vdwg.mxu0
    %v116 = vmax.f32 %v113, 0.0
    %117 = vst.msk [vmem:[#allocation2] sm:$0xff] %vm46, %v116
    // Predicated region
    $region18: #{tpu_custom_call.1} parent=1 // pred_check
      _
    $region19: #{tpu_custom_call.1} parent=1 // pred_check_branch
      %119 = sbr.rel (0) target = $region21
    $region20: #{tpu_custom_call.1} parent=1 // pred_region
      %121 = vsyncadd [#allocation3], 0
      %s123 = sshll.u32 [#allocation2], 4
      %s124 = int_to_ptr.vmem [resolvable:$true] %s123
      %s125 = sshll.u32 %s4, 4
      %s126 = int_to_ptr.hbm [resolvable:$true] %s125
      %128 = dma.vmem_to_hbm [thread:$0]  %s124, 128, %s126, [#allocation3]
    $region21: #{tpu_custom_call.1} parent=1 // pred_fallthru
      _
    // Predicated region
    $region22: #{tpu_custom_call.1} parent=1 // pred_check
      _
    $region23: #{tpu_custom_call.1} parent=1 // pred_check_branch
      %130 = sbr.rel (0) target = $region25
    $region24: #{tpu_custom_call.1} parent=1 // pred_region
      %132 = dma.done [#allocation3], 128
    $region25: #{tpu_custom_call.1} parent=1 // pred_fallthru
      _
    %133 = vsyncpa [#allocation3], 1

</llo_original>
